<compile_context>
chip_gen: v5e
topology: v5e:2x2
jax: 0.10.0
libtpu: 0.0.40
codegen_flags: <defaults>
</compile_context>

<pallas_src>
import functools

import jax
import jax.numpy as jnp
from jax import lax
from jax.experimental import pallas as pl
from jax.experimental.pallas import tpu as pltpu


# --------------------------------------------------------------------------- #
# Small helpers
# --------------------------------------------------------------------------- #
def _round_up(x: int, m: int) -> int:
    return ((x + m - 1) // m) * m


def _cdiv(a: int, b: int) -> int:
    return (a + b - 1) // b


def _vmem_cap_bytes() -> int:
    """Per-generation scoped-VMEM cap: ~75% of physical VMEM.

    -> ~48 MiB on v7x (64 MiB/TC), ~96 MiB on v5e/v6e (128 MiB)."""
    cap = 0
    try:
        info = pltpu.get_tpu_info()
        cap = int(getattr(info, "vmem_capacity_bytes", 0) or 0)
    except Exception:
        cap = 0
    if cap <= 0:
        cap = 64 << 20  # unknown -> assume the smallest (v7x-sized) part
    return (cap * 3) // 4


def _batch_tiles(B: int, block_b: int):
    """cdiv-based batch tiling.

    Waste is bounded by one sublane tile per grid step, and we use >= 2 grid
    steps whenever possible so megacore (v7x, 2 TCs) has work for both cores."""
    n = max(_cdiv(B, block_b), 2 if B >= 16 else 1)
    TB = _round_up(_cdiv(B, n), 8)
    return TB, n * TB, n


def _out_width(O: int) -> int:
    """Pad the output feature dim to a lane multiple only when the extra HBM
    writeback is modest (<= 2x).  Tiny outputs keep their exact width."""
    O_ru = _round_up(O, 128)
    if O == O_ru:
        return O
    return O_ru if O_ru <= 2 * O else O


def _pad_last(a, new):
    if a.shape[-1] == new:
        return a
    pad = [(0, 0)] * (a.ndim - 1) + [(0, new - a.shape[-1])]
    return jnp.pad(a, pad)


# --------------------------------------------------------------------------- #
# Kernels
# --------------------------------------------------------------------------- #
def _fused_mlp_kernel(compute_dtype, feat_ref, *refs):
    """One batch tile: in-kernel embedding gather (one-hot matmuls against the
    VMEM-resident tables), first linear accumulated per feature block, ReLU,
    output linear.  All MXU accumulation in f32."""
    n_emb = len(refs) - 5
    tbl_refs = refs[:n_emb]
    w1_ref, b1_ref, w2_ref, b2_ref, o_ref = refs[n_emb:]

    feat = feat_ref[...]                    # (TB, F) int32
    TB = feat.shape[0]
    Hp = w1_ref.shape[1]

    h = jnp.zeros((TB, Hp), jnp.float32)
    off = 0
    for i, tbl_ref in enumerate(tbl_refs):
        V, D = tbl_ref.shape
        idx = feat[:, i:i + 1]              # (TB, 1) int32
        onehot = (idx == lax.broadcasted_iota(jnp.int32, (TB, V), 1)
                  ).astype(compute_dtype)   # (TB, V)
        # Embedding rows for this feature column.
        emb = jnp.dot(onehot, tbl_ref[...],
                      preferred_element_type=jnp.float32)            # (TB, D)
        # Partial-K accumulation of x @ w1 (x is never materialized).
        h = h + jnp.dot(emb.astype(compute_dtype), w1_ref[off:off + D, :],
                        preferred_element_type=jnp.float32)          # (TB, Hp)
        off += D

    h = jnp.maximum(h + b1_ref[...], 0.0)   # bias (1, Hp) broadcasts; ReLU
    out = jnp.dot(h.astype(compute_dtype), w2_ref[...],
                  preferred_element_type=jnp.float32) + b2_ref[...]
    o_ref[...] = out


def _mlp_kernel(compute_dtype, x_ref, w1_ref, b1_ref, w2_ref, b2_ref, o_ref):
    """Unfused fallback: (TB, E) @ (E, Hp) + b1 -> relu -> @ (Hp, O_out) + b2."""
    h = jnp.dot(x_ref[...], w1_ref[...], preferred_element_type=jnp.float32)
    h = jnp.maximum(h + b1_ref[...], 0.0)
    out = jnp.dot(h.astype(compute_dtype), w2_ref[...],
                  preferred_element_type=jnp.float32)
    o_ref[...] = out + b2_ref[...]


# --------------------------------------------------------------------------- #
# pallas_call wrappers
# --------------------------------------------------------------------------- #
@functools.partial(jax.jit, static_argnames=("out_dim", "block_b"))
def fused_forward(features, tables, w1p, b1p, w2p, b2p, *, out_dim, block_b=512):
    """features: (B, F) int32; tables[i]: (V_i, D_i); w1p: (E, Hp); b1p: (1, Hp);
    w2p: (Hp, O_out); b2p: (1, O_out).  Returns (B, out_dim) f32."""
    B, F = features.shape
    E, Hp = w1p.shape
    O_out = w2p.shape[1]
    compute_dtype = w1p.dtype
    cap = _vmem_cap_bytes()

    # Resident operands are double-buffered by default -> budget 2x.
    resident = 2 * (sum(t.size * t.dtype.itemsize for t in tables)
                    + w1p.size * w1p.dtype.itemsize
                    + w2p.size * w2p.dtype.itemsize
                    + b1p.size * b1p.dtype.itemsize
                    + b2p.size * b2p.dtype.itemsize)
    max_v = max(int(t.shape[0]) for t in tables)

    def budget(tb):
        tile_io = 2 * tb * (F * 4 + O_out * 4)           # feat in + out, 2 bufs
        live = 4 * tb * (Hp + max_v + 64)                # h, one-hot, emb temps
        return resident + tile_io + live

    TB, B_pad, n_tiles = _batch_tiles(B, block_b)
    while budget(TB) + (4 << 20) > cap and TB > 8:       # shrink tile if needed
        TB = max(8, _round_up(TB // 2, 8))
        n_tiles = _cdiv(B, TB)
        B_pad = n_tiles * TB

    feat_p = features if B_pad == B else jnp.pad(features, ((0, B_pad - B), (0, 0)))
    vmem_limit = int(min(cap, max(budget(TB) * 1.3 + (2 << 20), 16 << 20)))

    sum_vd = sum(int(t.shape[0]) * int(t.shape[1]) for t in tables)
    cost = pl.CostEstimate(
        flops=2 * B_pad * (sum_vd + E * Hp + Hp * O_out),
        transcendentals=0,
        bytes_accessed=int(B_pad * F * 4 + resident // 2 + B_pad * O_out * 4),
    )

    in_specs = [pl.BlockSpec((TB, F), lambda i: (i, 0))]               # batch-tiled
    in_specs += [pl.BlockSpec(tuple(t.shape), lambda i: (0, 0)) for t in tables]
    in_specs += [
        pl.BlockSpec((E, Hp), lambda i: (0, 0)),                       # resident
        pl.BlockSpec((1, Hp), lambda i: (0, 0)),
        pl.BlockSpec((Hp, O_out), lambda i: (0, 0)),
        pl.BlockSpec((1, O_out), lambda i: (0, 0)),
    ]

    out = pl.pallas_call(
        functools.partial(_fused_mlp_kernel, compute_dtype),
        out_shape=jax.ShapeDtypeStruct((B_pad, O_out), jnp.float32),
        grid_spec=pltpu.PrefetchScalarGridSpec(
            num_scalar_prefetch=0,
            grid=(n_tiles,),
            in_specs=in_specs,
            out_specs=pl.BlockSpec((TB, O_out), lambda i: (i, 0)),
        ),
        compiler_params=pltpu.CompilerParams(
            dimension_semantics=("parallel",),       # megacore sharding on v7x
            vmem_limit_bytes=vmem_limit,
        ),
        cost_estimate=cost,
    )(feat_p, *tables, w1p, b1p, w2p, b2p)

    out = out if B_pad == B else out[:B]
    return out if O_out == out_dim else out[:, :out_dim]


@functools.partial(jax.jit, static_argnames=("out_dim", "block_b"))
def mlp_forward(x, w1p, b1p, w2p, b2p, *, out_dim, block_b=512):
    """Fallback (large-vocab) path: x (B, E) already gathered by XLA."""
    B, E = x.shape
    Hp = w1p.shape[1]
    O_out = w2p.shape[1]
    compute_dtype = w1p.dtype
    cap = _vmem_cap_bytes()
    itm = x.dtype.itemsize

    resident = 2 * (w1p.size * w1p.dtype.itemsize + w2p.size * w2p.dtype.itemsize
                    + b1p.size * b1p.dtype.itemsize + b2p.size * b2p.dtype.itemsize)

    def budget(tb):
        return resident + 2 * tb * (E * itm + O_out * 4) + 4 * tb * Hp

    TB, B_pad, n_tiles = _batch_tiles(B, block_b)
    while budget(TB) + (4 << 20) > cap and TB > 8:
        TB = max(8, _round_up(TB // 2, 8))
        n_tiles = _cdiv(B, TB)
        B_pad = n_tiles * TB

    x_p = x if B_pad == B else jnp.pad(x, ((0, B_pad - B), (0, 0)))
    vmem_limit = int(min(cap, max(budget(TB) * 1.3 + (2 << 20), 16 << 20)))

    cost = pl.CostEstimate(
        flops=2 * B_pad * (E * Hp + Hp * O_out),
        transcendentals=0,
        bytes_accessed=int(B_pad * E * itm + resident // 2 + B_pad * O_out * 4),
    )

    out = pl.pallas_call(
        functools.partial(_mlp_kernel, compute_dtype),
        out_shape=jax.ShapeDtypeStruct((B_pad, O_out), jnp.float32),
        grid_spec=pltpu.PrefetchScalarGridSpec(
            num_scalar_prefetch=0,
            grid=(n_tiles,),
            in_specs=[
                pl.BlockSpec((TB, E), lambda i: (i, 0)),
                pl.BlockSpec((E, Hp), lambda i: (0, 0)),
                pl.BlockSpec((1, Hp), lambda i: (0, 0)),
                pl.BlockSpec((Hp, O_out), lambda i: (0, 0)),
                pl.BlockSpec((1, O_out), lambda i: (0, 0)),
            ],
            out_specs=pl.BlockSpec((TB, O_out), lambda i: (i, 0)),
        ),
        compiler_params=pltpu.CompilerParams(
            dimension_semantics=("parallel",),
            vmem_limit_bytes=vmem_limit,
        ),
        cost_estimate=cost,
    )(x_p, w1p, b1p, w2p, b2p)

    out = out if B_pad == B else out[:B]
    return out if O_out == out_dim else out[:, :out_dim]


# --------------------------------------------------------------------------- #
# Module port
# --------------------------------------------------------------------------- #
class NetworkPallas:
    """JAX/Pallas port of the PyTorch `Network` module (forward only)."""

    def __init__(self, embedding_specs, hidden_dim, output_dim, key, *,
                 use_bf16=False):
        self.output_dim = output_dim
        self.hidden_dim = hidden_dim
        self.embedding_size = sum(d for _, d in embedding_specs)

        keys = jax.random.split(key, len(embedding_specs) + 4)
        # Embedding tables: normal(std=1e-2), as in the torch __init__.
        self.emb_tables = [
            jax.random.normal(keys[i], (v, d), dtype=jnp.float32) * 1e-2
            for i, (v, d) in enumerate(embedding_specs)
        ]
        n = len(embedding_specs)
        # nn.Linear default init: U(-1/sqrt(fan_in), 1/sqrt(fan_in)).
        lim1 = 1.0 / float(self.embedding_size) ** 0.5
        self.w1 = jax.random.uniform(keys[n + 0], (self.embedding_size, hidden_dim),
                                     minval=-lim1, maxval=lim1, dtype=jnp.float32)
        self.b1 = jax.random.uniform(keys[n + 1], (1, hidden_dim),
                                     minval=-lim1, maxval=lim1, dtype=jnp.float32)
        lim2 = 1.0 / float(hidden_dim) ** 0.5
        self.w2 = jax.random.uniform(keys[n + 2], (hidden_dim, output_dim),
                                     minval=-lim2, maxval=lim2, dtype=jnp.float32)
        self.b2 = jax.random.uniform(keys[n + 3], (1, output_dim),
                                     minval=-lim2, maxval=lim2, dtype=jnp.float32)

        # One-time kernel-side parameter prep (no per-call HBM weight copies).
        Hp = _round_up(hidden_dim, 128)             # lane-dense hidden dim
        O_out = _out_width(output_dim)              # conditional output padding
        cdt = jnp.bfloat16 if use_bf16 else jnp.float32
        self._w1p = _pad_last(self.w1, Hp).astype(cdt)
        self._b1p = _pad_last(self.b1, Hp)                              # f32 bias
        self._w2p = jnp.pad(self.w2, ((0, Hp - hidden_dim),
                                      (0, O_out - output_dim))).astype(cdt)
        self._b2p = _pad_last(self.b2, O_out)                           # f32 bias
        self._ktables = tuple(t.astype(cdt) for t in self.emb_tables)

        # Fuse the gather into the kernel only while the one-hot trick is cheap
        # and the (double-buffered) tables comfortably fit in VMEM.
        max_vocab = max(v for v, _ in embedding_specs)
        table_bytes = 2 * sum(t.size * t.dtype.itemsize for t in self._ktables)
        self._fused = (max_vocab <= 1024) and (table_bytes <= _vmem_cap_bytes() // 4)
        # TODO(synk): for large vocabularies, fuse via scalar-prefetch / DMA row
        # gather instead of one-hot matmuls and drop the XLA-gather fallback.

    def __call__(self, features):
        # features: (batch, num_features) integer ids, one column per table.
        features = features.astype(jnp.int32)
        if self._fused:
            out = fused_forward(features, self._ktables, self._w1p, self._b1p,
                                self._w2p, self._b2p, out_dim=self.output_dim)
        else:
            embs = [jnp.take(t, features[:, i], axis=0)
                    for i, t in enumerate(self._ktables)]
            x = jnp.concatenate(embs, axis=1)                   # (B, E)
            out = mlp_forward(x, self._w1p, self._b1p, self._w2p, self._b2p,
                              out_dim=self.output_dim)
        return out.reshape(-1, self.output_dim)


def _reference(net, features):
    """Pure-JAX reference of the same forward (sanity check)."""
    embs = [jnp.take(t, features[:, i], axis=0)
            for i, t in enumerate(net.emb_tables)]
    x = jnp.concatenate(embs, axis=1)
    h = jnp.maximum(x @ net.w1 + net.b1, 0.0)
    return (h @ net.w2 + net.b2).reshape(-1, net.output_dim)


def _make_features(key, specs, batch):
    cols = [jax.random.randint(jax.random.fold_in(key, i), (batch, 1), 0, v,
                               dtype=jnp.int32)
            for i, (v, _) in enumerate(specs)]
    return jnp.concatenate(cols, axis=1)


if __name__ == "__main__":
    key = jax.random.PRNGKey(0)
    k_params, k_feat = jax.random.split(key)

    # Case 1: fused in-kernel gather path, tiny shapes, batch multiple of 8.
    specs1 = [(50, 8), (30, 8), (20, 16)]       # embedding_size = 32
    net1 = NetworkPallas(specs1, hidden_dim=32, output_dim=8, key=k_params)
    feats1 = _make_features(k_feat, specs1, batch=8)
    out1 = jax.block_until_ready(net1(feats1))
    ref1 = _reference(net1, feats1)
    assert out1.shape == (8, 8)
    assert jnp.allclose(out1, ref1, atol=1e-5, rtol=1e-5)

    # Case 2: fused path, ragged batch (exercises batch padding / row slicing).
    feats2 = _make_features(jax.random.fold_in(k_feat, 1), specs1, batch=37)
    out2 = jax.block_until_ready(net1(feats2))
    ref2 = _reference(net1, feats2)
    assert out2.shape == (37, 8)
    assert jnp.allclose(out2, ref2, atol=1e-5, rtol=1e-5)

    # Case 3: large-vocab spec -> XLA-gather fallback + Pallas MLP kernel.
    specs3 = [(3000, 16), (40, 8)]
    net3 = NetworkPallas(specs3, hidden_dim=64, output_dim=12,
                         key=jax.random.fold_in(k_params, 3))
    feats3 = _make_features(jax.random.fold_in(k_feat, 3), specs3, batch=19)
    out3 = jax.block_until_ready(net3(feats3))
    ref3 = _reference(net3, feats3)
    assert out3.shape == (19, 12)
    assert jnp.allclose(out3, ref3, atol=1e-5, rtol=1e-5)

    print("KERNEL_OK")
</pallas_src>

<mosaic_0001>
module attributes {stable_mosaic.version = 11 : i64} {
  func.func @_fused_mlp_kernel(%arg0: i32, %arg1: memref<8x3xi32, #tpu.memory_space<vmem>>, %arg2: memref<50x8xf32, #tpu.memory_space<vmem>>, %arg3: memref<30x8xf32, #tpu.memory_space<vmem>>, %arg4: memref<20x16xf32, #tpu.memory_space<vmem>>, %arg5: memref<32x128xf32, #tpu.memory_space<vmem>>, %arg6: memref<1x128xf32, #tpu.memory_space<vmem>>, %arg7: memref<128x8xf32, #tpu.memory_space<vmem>>, %arg8: memref<1x8xf32, #tpu.memory_space<vmem>>, %arg9: memref<8x8xf32, #tpu.memory_space<vmem>>) attributes {dimension_semantics = [#tpu.dimension_semantics<parallel>], iteration_bounds = array<i64: 1>, scalar_prefetch = 0 : i64, scratch_operands = 0 : i64, tpu.core_type = #tpu.core_type<tc>, window_params = [{transform_indices = @transform_0, window_bounds = array<i64: 8, 3>}, {pipeline_mode = #tpu.pipeline_mode<synchronous>, transform_indices = @transform_1, window_bounds = array<i64: 50, 8>}, {pipeline_mode = #tpu.pipeline_mode<synchronous>, transform_indices = @transform_2, window_bounds = array<i64: 30, 8>}, {pipeline_mode = #tpu.pipeline_mode<synchronous>, transform_indices = @transform_3, window_bounds = array<i64: 20, 16>}, {pipeline_mode = #tpu.pipeline_mode<synchronous>, transform_indices = @transform_4, window_bounds = array<i64: 32, 128>}, {pipeline_mode = #tpu.pipeline_mode<synchronous>, transform_indices = @transform_5, window_bounds = array<i64: 1, 128>}, {pipeline_mode = #tpu.pipeline_mode<synchronous>, transform_indices = @transform_6, window_bounds = array<i64: 128, 8>}, {pipeline_mode = #tpu.pipeline_mode<synchronous>, transform_indices = @transform_7, window_bounds = array<i64: 1, 8>}, {transform_indices = @transform_8, window_bounds = array<i64: 8, 8>}]} {
    %c0 = arith.constant 0 : index
    %c0_0 = arith.constant 0 : index
    %0 = vector.load %arg1[%c0, %c0_0] : memref<8x3xi32, #tpu.memory_space<vmem>>, vector<8x3xi32>
    %cst = arith.constant 0.000000e+00 : f32
    %1 = vector.broadcast %cst : f32 to vector<8x128xf32>
    %2 = vector.extract_strided_slice %0 {offsets = [0, 0], sizes = [8, 1], strides = [1, 1]} : vector<8x3xi32> to vector<8x1xi32>
    %3 = tpu.iota {dimensions = array<i32: 1>} : vector<8x50xi32>
    %4 = vector.broadcast %2 : vector<8x1xi32> to vector<8x50xi32>
    %5 = arith.cmpi eq, %4, %3 : vector<8x50xi32>
    %6 = arith.extui %5 : vector<8x50xi1> to vector<8x50xi32>
    %7 = arith.sitofp %6 : vector<8x50xi32> to vector<8x50xf32>
    %c0_1 = arith.constant 0 : index
    %c0_2 = arith.constant 0 : index
    %8 = vector.load %arg2[%c0_1, %c0_2] : memref<50x8xf32, #tpu.memory_space<vmem>>, vector<50x8xf32>
    %cst_3 = arith.constant dense<0.000000e+00> : vector<8x8xf32>
    %9 = tpu.matmul %7, %8, %cst_3 {dimension_numbers = #tpu.dot_dimension_numbers<[1], [0], [0], [1], [0, 0, 1, 1], [], []>} : vector<8x50xf32>, vector<50x8xf32>, vector<8x8xf32> -> vector<8x8xf32>
    %c0_4 = arith.constant 0 : index
    %c0_5 = arith.constant 0 : index
    %10 = vector.load %arg5[%c0_4, %c0_5] : memref<32x128xf32, #tpu.memory_space<vmem>>, vector<8x128xf32>
    %cst_6 = arith.constant dense<0.000000e+00> : vector<8x128xf32>
    %11 = tpu.matmul %9, %10, %cst_6 {dimension_numbers = #tpu.dot_dimension_numbers<[1], [0], [0], [1], [0, 0, 1, 1], [], []>} : vector<8x8xf32>, vector<8x128xf32>, vector<8x128xf32> -> vector<8x128xf32>
    %12 = arith.addf %1, %11 : vector<8x128xf32>
    %13 = vector.extract_strided_slice %0 {offsets = [0, 1], sizes = [8, 1], strides = [1, 1]} : vector<8x3xi32> to vector<8x1xi32>
    %14 = tpu.iota {dimensions = array<i32: 1>} : vector<8x30xi32>
    %15 = vector.broadcast %13 : vector<8x1xi32> to vector<8x30xi32>
    %16 = arith.cmpi eq, %15, %14 : vector<8x30xi32>
    %17 = arith.extui %16 : vector<8x30xi1> to vector<8x30xi32>
    %18 = arith.sitofp %17 : vector<8x30xi32> to vector<8x30xf32>
    %c0_7 = arith.constant 0 : index
    %c0_8 = arith.constant 0 : index
    %19 = vector.load %arg3[%c0_7, %c0_8] : memref<30x8xf32, #tpu.memory_space<vmem>>, vector<30x8xf32>
    %cst_9 = arith.constant dense<0.000000e+00> : vector<8x8xf32>
    %20 = tpu.matmul %18, %19, %cst_9 {dimension_numbers = #tpu.dot_dimension_numbers<[1], [0], [0], [1], [0, 0, 1, 1], [], []>} : vector<8x30xf32>, vector<30x8xf32>, vector<8x8xf32> -> vector<8x8xf32>
    %c8 = arith.constant 8 : index
    %c0_10 = arith.constant 0 : index
    %21 = vector.load %arg5[%c8, %c0_10] : memref<32x128xf32, #tpu.memory_space<vmem>>, vector<8x128xf32>
    %cst_11 = arith.constant dense<0.000000e+00> : vector<8x128xf32>
    %22 = tpu.matmul %20, %21, %cst_11 {dimension_numbers = #tpu.dot_dimension_numbers<[1], [0], [0], [1], [0, 0, 1, 1], [], []>} : vector<8x8xf32>, vector<8x128xf32>, vector<8x128xf32> -> vector<8x128xf32>
    %23 = arith.addf %12, %22 : vector<8x128xf32>
    %24 = vector.extract_strided_slice %0 {offsets = [0, 2], sizes = [8, 1], strides = [1, 1]} : vector<8x3xi32> to vector<8x1xi32>
    %25 = tpu.iota {dimensions = array<i32: 1>} : vector<8x20xi32>
    %26 = vector.broadcast %24 : vector<8x1xi32> to vector<8x20xi32>
    %27 = arith.cmpi eq, %26, %25 : vector<8x20xi32>
    %28 = arith.extui %27 : vector<8x20xi1> to vector<8x20xi32>
    %29 = arith.sitofp %28 : vector<8x20xi32> to vector<8x20xf32>
    %c0_12 = arith.constant 0 : index
    %c0_13 = arith.constant 0 : index
    %30 = vector.load %arg4[%c0_12, %c0_13] : memref<20x16xf32, #tpu.memory_space<vmem>>, vector<20x16xf32>
    %cst_14 = arith.constant dense<0.000000e+00> : vector<8x16xf32>
    %31 = tpu.matmul %29, %30, %cst_14 {dimension_numbers = #tpu.dot_dimension_numbers<[1], [0], [0], [1], [0, 0, 1, 1], [], []>} : vector<8x20xf32>, vector<20x16xf32>, vector<8x16xf32> -> vector<8x16xf32>
    %c16 = arith.constant 16 : index
    %c0_15 = arith.constant 0 : index
    %32 = vector.load %arg5[%c16, %c0_15] : memref<32x128xf32, #tpu.memory_space<vmem>>, vector<16x128xf32>
    %cst_16 = arith.constant dense<0.000000e+00> : vector<8x128xf32>
    %33 = tpu.matmul %31, %32, %cst_16 {dimension_numbers = #tpu.dot_dimension_numbers<[1], [0], [0], [1], [0, 0, 1, 1], [], []>} : vector<8x16xf32>, vector<16x128xf32>, vector<8x128xf32> -> vector<8x128xf32>
    %34 = arith.addf %23, %33 : vector<8x128xf32>
    %c0_17 = arith.constant 0 : index
    %c0_18 = arith.constant 0 : index
    %35 = vector.load %arg6[%c0_17, %c0_18] : memref<1x128xf32, #tpu.memory_space<vmem>>, vector<1x128xf32>
    %36 = vector.broadcast %35 : vector<1x128xf32> to vector<8x128xf32>
    %37 = arith.addf %34, %36 : vector<8x128xf32>
    %cst_19 = arith.constant 0.000000e+00 : f32
    %38 = vector.broadcast %cst_19 : f32 to vector<8x128xf32>
    %39 = arith.maximumf %37, %38 : vector<8x128xf32>
    %c0_20 = arith.constant 0 : index
    %c0_21 = arith.constant 0 : index
    %40 = vector.load %arg7[%c0_20, %c0_21] : memref<128x8xf32, #tpu.memory_space<vmem>>, vector<128x8xf32>
    %cst_22 = arith.constant dense<0.000000e+00> : vector<8x8xf32>
    %41 = tpu.matmul %39, %40, %cst_22 {dimension_numbers = #tpu.dot_dimension_numbers<[1], [0], [0], [1], [0, 0, 1, 1], [], []>} : vector<8x128xf32>, vector<128x8xf32>, vector<8x8xf32> -> vector<8x8xf32>
    %c0_23 = arith.constant 0 : index
    %c0_24 = arith.constant 0 : index
    %42 = vector.load %arg8[%c0_23, %c0_24] : memref<1x8xf32, #tpu.memory_space<vmem>>, vector<1x8xf32>
    %43 = vector.broadcast %42 : vector<1x8xf32> to vector<8x8xf32>
    %44 = arith.addf %41, %43 : vector<8x8xf32>
    %c0_25 = arith.constant 0 : index
    %c0_26 = arith.constant 0 : index
    %45 = vector.load %arg9[%c0_25, %c0_26] : memref<8x8xf32, #tpu.memory_space<vmem>>, vector<8x8xf32>
    tpu.vector_store %arg9[%c0_25, %c0_26], %44 {strides = array<i32>} : memref<8x8xf32, #tpu.memory_space<vmem>>, vector<8x8xf32>,
    return
  }
  func.func @transform_0(%arg0: i32) -> (i32, i32) {
    %c0_i32 = arith.constant 0 : i32
    %c0_i32_0 = arith.constant 0 : i32
    return %arg0, %c0_i32 : i32, i32
  }
  func.func @transform_1(%arg0: i32) -> (i32, i32) {
    %c0_i32 = arith.constant 0 : i32
    %c0_i32_0 = arith.constant 0 : i32
    %c0_i32_1 = arith.constant 0 : i32
    return %c0_i32, %c0_i32_0 : i32, i32
  }
  func.func @transform_2(%arg0: i32) -> (i32, i32) {
    %c0_i32 = arith.constant 0 : i32
    %c0_i32_0 = arith.constant 0 : i32
    %c0_i32_1 = arith.constant 0 : i32
    return %c0_i32, %c0_i32_0 : i32, i32
  }
  func.func @transform_3(%arg0: i32) -> (i32, i32) {
    %c0_i32 = arith.constant 0 : i32
    %c0_i32_0 = arith.constant 0 : i32
    %c0_i32_1 = arith.constant 0 : i32
    return %c0_i32, %c0_i32_0 : i32, i32
  }
  func.func @transform_4(%arg0: i32) -> (i32, i32) {
    %c0_i32 = arith.constant 0 : i32
    %c0_i32_0 = arith.constant 0 : i32
    %c0_i32_1 = arith.constant 0 : i32
    return %c0_i32, %c0_i32_0 : i32, i32
  }
  func.func @transform_5(%arg0: i32) -> (i32, i32) {
    %c0_i32 = arith.constant 0 : i32
    %c0_i32_0 = arith.constant 0 : i32
    %c0_i32_1 = arith.constant 0 : i32
    return %c0_i32, %c0_i32_0 : i32, i32
  }
  func.func @transform_6(%arg0: i32) -> (i32, i32) {
    %c0_i32 = arith.constant 0 : i32
    %c0_i32_0 = arith.constant 0 : i32
    %c0_i32_1 = arith.constant 0 : i32
    return %c0_i32, %c0_i32_0 : i32, i32
  }
  func.func @transform_7(%arg0: i32) -> (i32, i32) {
    %c0_i32 = arith.constant 0 : i32
    %c0_i32_0 = arith.constant 0 : i32
    %c0_i32_1 = arith.constant 0 : i32
    return %c0_i32, %c0_i32_0 : i32, i32
  }
  func.func @transform_8(%arg0: i32) -> (i32, i32) {
    %c0_i32 = arith.constant 0 : i32
    %c0_i32_0 = arith.constant 0 : i32
    return %arg0, %c0_i32 : i32, i32
  }
}

</mosaic_0001>

<llo_original>
// kernel: fused_forward.1
$region0: #{fused_forward.1}
  #allocation0 [shape = 'u32[]', space=smem, size = 0x4, offset = 0x4, fixed_abs, tag = 'smem constant byte address 0x4 - core index']
  #allocation1 [shape = 'u32[72,128]{1,0:T(1,128)}', space=vmem, size = 0x9000, scoped, tag = 'internal scratch']
  %s0 = inlined_call_operand.vmem [shape: s32[8,3], index: 0, kind: input, shape index: {}]
  %s1 = inlined_call_operand.vmem [shape: f32[50,8], index: 1, kind: input, shape index: {}]
  %s2 = inlined_call_operand.vmem [shape: f32[30,8], index: 2, kind: input, shape index: {}]
  %s3 = inlined_call_operand.vmem [shape: f32[20,16], index: 3, kind: input, shape index: {}]
  %s4 = inlined_call_operand.vmem [shape: f32[32,128], index: 4, kind: input, shape index: {}]
  %s5 = inlined_call_operand.vmem [shape: f32[1,128], index: 5, kind: input, shape index: {}]
  %s6 = inlined_call_operand.vmem [shape: f32[128,8], index: 6, kind: input, shape index: {}]
  %s7 = inlined_call_operand.vmem [shape: f32[1,8], index: 7, kind: input, shape index: {}]
  %s8 = inlined_call_operand.hbm [shape: f32[8,8], index: 8, kind: output, shape index: {}]
  %s9 = sld [smem:[#allocation0]]
  $region42: #{fused_forward.1} parent=0
    _
  %s11 = ssub.s32 1, %s9
  %s12 = scalar_select 0, %s11, %s9
  $region1: #{fused_forward.1} parent=0
    #allocation2 [shape = 'u8[4096]{0}', space=vmem, size = 0x1000, scoped, tag = 'output window, operand 0, single buffered']
    #allocation3 [shape = 's32[1]{0}', space=sflag, size = 0x4, scoped, tag = 'scoped memory for fused_forward.1']
    %13 = vsyncpa [#allocation3], 0
    // Predicated region
    $region2: #{fused_forward.1} parent=1 // pred_check
      _
    $region3: #{fused_forward.1} parent=1 // pred_check_branch
      %15 = sbr.rel (0) target = $region5
    $region4: #{fused_forward.1} parent=1 // pred_region
      _
    $region5: #{fused_forward.1} parent=1 // pred_fallthru
      _
    // Predicated region
    $region6: #{fused_forward.1} parent=1 // pred_check
      _
    $region7: #{fused_forward.1} parent=1 // pred_check_branch
      %17 = sbr.rel (0) target = $region9
    $region8: #{fused_forward.1} parent=1 // pred_region
      _
    $region9: #{fused_forward.1} parent=1 // pred_fallthru
      _
    // Predicated region
    $region10: #{fused_forward.1} parent=1 // pred_check
      _
    $region11: #{fused_forward.1} parent=1 // pred_check_branch
      %19 = sbr.rel (0) target = $region13
    $region12: #{fused_forward.1} parent=1 // pred_region
      _
    $region13: #{fused_forward.1} parent=1 // pred_fallthru
      _
    // Predicated region
    $region14: #{fused_forward.1} parent=1 // pred_check
      _
    $region15: #{fused_forward.1} parent=1 // pred_check_branch
      %21 = sbr.rel (0) target = $region17
    $region16: #{fused_forward.1} parent=1 // pred_region
      _
    $region17: #{fused_forward.1} parent=1 // pred_fallthru
      _
    // Predicated region
    $region18: #{fused_forward.1} parent=1 // pred_check
      _
    $region19: #{fused_forward.1} parent=1 // pred_check_branch
      %23 = sbr.rel (0) target = $region21
    $region20: #{fused_forward.1} parent=1 // pred_region
      _
    $region21: #{fused_forward.1} parent=1 // pred_fallthru
      _
    // Predicated region
    $region22: #{fused_forward.1} parent=1 // pred_check
      _
    $region23: #{fused_forward.1} parent=1 // pred_check_branch
      %25 = sbr.rel (0) target = $region25
    $region24: #{fused_forward.1} parent=1 // pred_region
      _
    $region25: #{fused_forward.1} parent=1 // pred_fallthru
      _
    // Predicated region
    $region26: #{fused_forward.1} parent=1 // pred_check
      _
    $region27: #{fused_forward.1} parent=1 // pred_check_branch
      %27 = sbr.rel (0) target = $region29
    $region28: #{fused_forward.1} parent=1 // pred_region
      _
    $region29: #{fused_forward.1} parent=1 // pred_fallthru
      _
    // Predicated region
    $region30: #{fused_forward.1} parent=1 // pred_check
      _
    $region31: #{fused_forward.1} parent=1 // pred_check_branch
      %29 = sbr.rel (0) target = $region33
    $region32: #{fused_forward.1} parent=1 // pred_region
      _
    $region33: #{fused_forward.1} parent=1 // pred_fallthru
      _
    %v30 = vld [vmem:[%s0] sm:$0xff]
    %v31 = vlaneseq
    %v32 = vand.u32 %v31, 127
    %33 = vset.pattern.permute.xlu0 0
    %34 = vperm.xlu0 %33, %v30
    %v35 = vpop.permute.xlu0 %34
    %vm36 = vcmp.eq.s32.totalorder %v35, %v32
    %v37 = vsel %vm36, 1, 0
    %v38 = vcvt.s32.f32 %v37
    %v39 = vld [vmem:[%s1] sm:$0xff]
    %v40 = vld [vmem:[%s1 + $0x8] sm:$0xff]
    %v41 = vld [vmem:[%s1 + $0x10] sm:$0xff]
    %v42 = vld [vmem:[%s1 + $0x18] sm:$0xff]
    %v43 = vld [vmem:[%s1 + $0x20] sm:$0xff]
    %v44 = vld [vmem:[%s1 + $0x28] sm:$0xff]
    %v45 = vld [vmem:[%s1 + $0x30] sm:$0x3]
    %vm46 = vcmask 408576
    %v48 = vsel %vm46, %v38, 0
    %vm50 = vcmask 1041408
    %v52 = vsel %vm50, %v45, 0
    %54 = vmatpush.msra.mxu0 0.0
    %55 = vmatpush.msra.mxu0 0.0
    %56 = vmatpush.msra.mxu0 0.0
    %57 = vmatpush.msra.mxu0 0.0
    %58 = vmatpush.msra.mxu0 0.0
    %59 = vmatpush.msra.mxu0 0.0
    %60 = vmatpush.msra.mxu0 0.0
    %61 = vmatpush.msra.mxu0 0.0
    %62 = vmatpush.msra.mxu0 0.0
    %63 = vmatpush.msra.mxu0 %v52
    %64 = vmatpush.msra.mxu0 %v44
    %65 = vmatpush.msra.mxu0 %v43
    %66 = vmatpush.msra.mxu0 %v42
    %67 = vmatpush.msra.mxu0 %v41
    %68 = vmatpush.msra.mxu0 %v40
    %69 = vmatpush.msra.mxu0 %v39
    %70 = vmatmul.f32.gmra.mxu0 %v48
    %v71 = vpop.f32.mrf.mxu0
    %v72 = vadd.f32 0.0, %v71
    %73 = vdwg.mxu0
    %v74 = vld [vmem:[%s4] sm:$0xff]
    %75 = vset.pattern.permute.xlu0 1
    %76 = vperm.xlu0 %75, %v30
    %v77 = vpop.permute.xlu0 %76
    %vm78 = vcmp.eq.s32.totalorder %v77, %v32
    %v79 = vsel %vm78, 1, 0
    %v80 = vcvt.s32.f32 %v79
    %v81 = vld [vmem:[%s2] sm:$0xff]
    %v82 = vld [vmem:[%s2 + $0x8] sm:$0xff]
    %v83 = vld [vmem:[%s2 + $0x10] sm:$0xff]
    %v84 = vld [vmem:[%s2 + $0x18] sm:$0x3f]
    %vm85 = vcmask 244736
    %v87 = vsel %vm85, %v80, 0
    %vm89 = vcmask 1045504
    %v91 = vsel %vm89, %v84, 0
    %93 = vmatpush.msra.mxu0 0.0
    %94 = vmatpush.msra.mxu0 0.0
    %95 = vmatpush.msra.mxu0 0.0
    %96 = vmatpush.msra.mxu0 0.0
    %97 = vmatpush.msra.mxu0 0.0
    %98 = vmatpush.msra.mxu0 0.0
    %99 = vmatpush.msra.mxu0 0.0
    %100 = vmatpush.msra.mxu0 0.0
    %101 = vmatpush.msra.mxu0 0.0
    %102 = vmatpush.msra.mxu0 0.0
    %103 = vmatpush.msra.mxu0 0.0
    %104 = vmatpush.msra.mxu0 0.0
    %105 = vmatpush.msra.mxu0 %v91
    %106 = vmatpush.msra.mxu0 %v83
    %107 = vmatpush.msra.mxu0 %v82
    %108 = vmatpush.msra.mxu0 %v81
    %109 = vmatmul.f32.gmra.mxu0 %v87
    %v110 = vpop.f32.mrf.mxu0
    %v111 = vadd.f32 0.0, %v110
    %112 = vdwg.mxu0
    %v113 = vld [vmem:[%s4 + $0x8] sm:$0xff]
    %vm114 = vcmask 64512
    %v116 = vsel %vm114, %v111, 0
    %118 = vmatpush.msra.mxu0 0.0
    %119 = vmatpush.msra.mxu0 0.0
    %120 = vmatpush.msra.mxu0 0.0
    %121 = vmatpush.msra.mxu0 0.0
    %122 = vmatpush.msra.mxu0 0.0
    %123 = vmatpush.msra.mxu0 0.0
    %124 = vmatpush.msra.mxu0 0.0
    %125 = vmatpush.msra.mxu0 0.0
    %126 = vmatpush.msra.mxu0 0.0
    %127 = vmatpush.msra.mxu0 0.0
    %128 = vmatpush.msra.mxu0 0.0
    %129 = vmatpush.msra.mxu0 0.0
    %130 = vmatpush.msra.mxu0 0.0
    %131 = vmatpush.msra.mxu0 0.0
    %132 = vmatpush.msra.mxu0 0.0
    %133 = vmatpush.msra.mxu0 %v113
    %134 = vmatmul.f32.gmra.mxu0 %v116
    %v135 = vpop.f32.mrf.mxu0
    %v136 = vadd.f32 0.0, %v135
    %137 = vdwg.mxu0
    %v139 = vsel %vm114, %v72, 0
    %141 = vmatpush.msra.mxu0 0.0
    %142 = vmatpush.msra.mxu0 0.0
    %143 = vmatpush.msra.mxu0 0.0
    %144 = vmatpush.msra.mxu0 0.0
    %145 = vmatpush.msra.mxu0 0.0
    %146 = vmatpush.msra.mxu0 0.0
    %147 = vmatpush.msra.mxu0 0.0
    %148 = vmatpush.msra.mxu0 0.0
    %149 = vmatpush.msra.mxu0 0.0
    %150 = vmatpush.msra.mxu0 0.0
    %151 = vmatpush.msra.mxu0 0.0
    %152 = vmatpush.msra.mxu0 0.0
    %153 = vmatpush.msra.mxu0 0.0
    %154 = vmatpush.msra.mxu0 0.0
    %155 = vmatpush.msra.mxu0 0.0
    %156 = vmatpush.msra.mxu0 %v74
    %157 = vmatmul.f32.gmra.mxu0 %v139
    %v158 = vpop.f32.mrf.mxu0
    %v159 = vadd.f32 %v136, %v158
    %160 = vdwg.mxu0
    %161 = vset.pattern.permute.xlu0 2
    %162 = vperm.xlu0 %161, %v30
    %v163 = vpop.permute.xlu0 %162
    %vm164 = vcmp.eq.s32.totalorder %v163, %v32
    %v165 = vsel %vm164, 1, 0
    %v166 = vcvt.s32.f32 %v165
    %v167 = vld [vmem:[%s3] sm:$0xff]
    %v168 = vld [vmem:[%s3 + $0x8] sm:$0xff]
    %v169 = vld [vmem:[%s3 + $0x10] sm:$0xf]
    %vm170 = vcmask 162816
    %v172 = vsel %vm170, %v166, 0
    %vm174 = vcmask 1043456
    %v176 = vsel %vm174, %v169, 0
    %178 = vmatpush.msra.mxu0 0.0
    %179 = vmatpush.msra.mxu0 0.0
    %180 = vmatpush.msra.mxu0 0.0
    %181 = vmatpush.msra.mxu0 0.0
    %182 = vmatpush.msra.mxu0 0.0
    %183 = vmatpush.msra.mxu0 0.0
    %184 = vmatpush.msra.mxu0 0.0
    %185 = vmatpush.msra.mxu0 0.0
    %186 = vmatpush.msra.mxu0 0.0
    %187 = vmatpush.msra.mxu0 0.0
    %188 = vmatpush.msra.mxu0 0.0
    %189 = vmatpush.msra.mxu0 0.0
    %190 = vmatpush.msra.mxu0 0.0
    %191 = vmatpush.msra.mxu0 %v176
    %192 = vmatpush.msra.mxu0 %v168
    %193 = vmatpush.msra.mxu0 %v167
    %194 = vmatmul.f32.gmra.mxu0 %v172
    %v195 = vpop.f32.mrf.mxu0
    %v196 = vadd.f32 0.0, %v195
    %197 = vdwg.mxu0
    %v198 = vld [vmem:[%s4 + $0x10] sm:$0xff]
    %v199 = vld [vmem:[%s4 + $0x18] sm:$0xff]
    %vm200 = vcmask 130048
    %v202 = vsel %vm200, %v196, 0
    %204 = vmatpush.msra.mxu0 0.0
    %205 = vmatpush.msra.mxu0 0.0
    %206 = vmatpush.msra.mxu0 0.0
    %207 = vmatpush.msra.mxu0 0.0
    %208 = vmatpush.msra.mxu0 0.0
    %209 = vmatpush.msra.mxu0 0.0
    %210 = vmatpush.msra.mxu0 0.0
    %211 = vmatpush.msra.mxu0 0.0
    %212 = vmatpush.msra.mxu0 0.0
    %213 = vmatpush.msra.mxu0 0.0
    %214 = vmatpush.msra.mxu0 0.0
    %215 = vmatpush.msra.mxu0 0.0
    %216 = vmatpush.msra.mxu0 0.0
    %217 = vmatpush.msra.mxu0 0.0
    %218 = vmatpush.msra.mxu0 %v199
    %219 = vmatpush.msra.mxu0 %v198
    %220 = vmatmul.f32.gmra.mxu0 %v202
    %v221 = vpop.f32.mrf.mxu0
    %v222 = vadd.f32 0.0, %v221
    %223 = vdwg.mxu0
    %v224 = vadd.f32 %v159, %v222
    %v225 = vld [vmem:[%s5] sm:$0x1]
    %v227 = vperm.slane %v225, 0
    %v229 = vadd.f32 %v224, %v227
    %v230 = vmax.f32 %v229, 0.0
    %v231 = vld [vmem:[%s6] sm:$0xff]
    %v232 = vld [vmem:[%s6 + $0x8] sm:$0xff]
    %v233 = vld [vmem:[%s6 + $0x10] sm:$0xff]
    %v234 = vld [vmem:[%s6 + $0x18] sm:$0xff]
    %v235 = vld [vmem:[%s6 + $0x20] sm:$0xff]
    %v236 = vld [vmem:[%s6 + $0x28] sm:$0xff]
    %v237 = vld [vmem:[%s6 + $0x30] sm:$0xff]
    %v238 = vld [vmem:[%s6 + $0x38] sm:$0xff]
    %v239 = vld [vmem:[%s6 + $0x40] sm:$0xff]
    %v240 = vld [vmem:[%s6 + $0x48] sm:$0xff]
    %v241 = vld [vmem:[%s6 + $0x50] sm:$0xff]
    %v242 = vld [vmem:[%s6 + $0x58] sm:$0xff]
    %v243 = vld [vmem:[%s6 + $0x60] sm:$0xff]
    %v244 = vld [vmem:[%s6 + $0x68] sm:$0xff]
    %v245 = vld [vmem:[%s6 + $0x70] sm:$0xff]
    %v246 = vld [vmem:[%s6 + $0x78] sm:$0xff]
    %v247 = vld [vmem:[%s7] sm:$0x1]
    %v249 = vperm.slane %v247, 0
    %251 = vmatpush.msra.mxu0 %v246
    %252 = vmatpush.msra.mxu0 %v245
    %253 = vmatpush.msra.mxu0 %v244
    %254 = vmatpush.msra.mxu0 %v243
    %255 = vmatpush.msra.mxu0 %v242
    %256 = vmatpush.msra.mxu0 %v241
    %257 = vmatpush.msra.mxu0 %v240
    %258 = vmatpush.msra.mxu0 %v239
    %259 = vmatpush.msra.mxu0 %v238
    %260 = vmatpush.msra.mxu0 %v237
    %261 = vmatpush.msra.mxu0 %v236
    %262 = vmatpush.msra.mxu0 %v235
    %263 = vmatpush.msra.mxu0 %v234
    %264 = vmatpush.msra.mxu0 %v233
    %265 = vmatpush.msra.mxu0 %v232
    %266 = vmatpush.msra.mxu0 %v231
    %267 = vmatmul.f32.gmra.mxu0 %v230
    %v268 = vpop.f32.mrf.mxu0
    %v269 = vadd.f32 %v249, %v268
    %270 = vdwg.mxu0
    %271 = vst.msk [vmem:[#allocation2] sm:$0xff] %vm114, %v269
    // Predicated region
    $region34: #{fused_forward.1} parent=1 // pred_check
      _
    $region35: #{fused_forward.1} parent=1 // pred_check_branch
      %273 = sbr.rel (0) target = $region37
    $region36: #{fused_forward.1} parent=1 // pred_region
      %275 = vsyncadd [#allocation3], 0
      %s277 = sshll.u32 [#allocation2], 4
      %s278 = int_to_ptr.vmem [resolvable:$true] %s277
      %s279 = sshll.u32 %s8, 4
      %s280 = int_to_ptr.hbm [resolvable:$true] %s279
      %282 = dma.vmem_to_hbm [thread:$0]  %s278, 128, %s280, [#allocation3]
    $region37: #{fused_forward.1} parent=1 // pred_fallthru
      _
    // Predicated region
    $region38: #{fused_forward.1} parent=1 // pred_check
      _
    $region39: #{fused_forward.1} parent=1 // pred_check_branch
      %284 = sbr.rel (0) target = $region41
    $region40: #{fused_forward.1} parent=1 // pred_region
      %286 = dma.done [#allocation3], 128
    $region41: #{fused_forward.1} parent=1 // pred_fallthru
      _
    %287 = vsyncpa [#allocation3], 1

</llo_original>
